<compile_context>
chip_gen: v5e
topology: v5e:2x2
jax: 0.10.0
libtpu: 0.0.40
codegen_flags: <defaults>
</compile_context>

<pallas_src>
import functools

import jax
import jax.numpy as jnp
from jax.experimental import pallas as pl
from jax.experimental.pallas import tpu as pltpu

EPS = 1e-6
NUM_BINS = 50
BIN_WIDTH = 0.02
BIN_SUB = 56            # sublane-padded bin count for the in-kernel one-hot
NUM_BINS_LANE = 128     # lane-padded histogram output row (sliced to 50 outside)


def _iou_kernel(nvalid_ref, p_ref, g_ref, max_ref, sum_ref, hist_ref,
                hist_acc, sum_vec, *, g_resident):
    # nvalid_ref: SMEM (1,) i32
    # p_ref:      (4, P, tn) f32
    # g_ref:      (4, 1, n_pad) f32 if g_resident else (4, 1, tn) f32
    # max_ref:    (1, tn) f32        per-gt best IoU, lane dense
    # sum_ref:    (1, 1, 1) f32      per-outer-chunk IoU sum (finalize only)
    # hist_ref:   (1, 1, 128) i32    per-outer-chunk histogram row (finalize only)
    # hist_acc:   VMEM (56, tn) f32  resident one-hot accumulator
    # sum_vec:    VMEM (1, tn) f32   resident per-lane max-IoU accumulator
    o = pl.program_id(0)
    i = pl.program_id(1)
    n_inner = pl.num_programs(1)
    tn = max_ref.shape[1]
    tile = o * n_inner + i                        # global lane-tile index
    off = pl.multiple_of(tile * tn, 128)          # global gt/lane offset

    @pl.when(i == 0)
    def _init():
        hist_acc[...] = jnp.zeros_like(hist_acc)
        sum_vec[...] = jnp.zeros_like(sum_vec)

    px1, py1, px2, py2 = p_ref[0], p_ref[1], p_ref[2], p_ref[3]      # (P, tn)
    if g_resident:
        gx1 = g_ref[0, :, pl.ds(off, tn)]                            # (1, tn)
        gy1 = g_ref[1, :, pl.ds(off, tn)]
        gx2 = g_ref[2, :, pl.ds(off, tn)]
        gy2 = g_ref[3, :, pl.ds(off, tn)]
    else:
        gx1, gy1, gx2, gy2 = g_ref[0], g_ref[1], g_ref[2], g_ref[3]  # (1, tn)

    # aligned bbox_overlaps (mmdet), is_aligned=True, mode='iou'
    w = jnp.maximum(jnp.minimum(px2, gx2) - jnp.maximum(px1, gx1), 0.0)
    h = jnp.maximum(jnp.minimum(py2, gy2) - jnp.maximum(py1, gy1), 0.0)
    overlap = w * h
    area1 = (px2 - px1) * (py2 - py1)
    area2 = (gx2 - gx1) * (gy2 - gy1)
    union = jnp.maximum(area1 + area2 - overlap, EPS)
    iou = overlap * pl.reciprocal(union, approx=False)               # (P, tn)

    # per-gt best proposal IoU; lane-dense output row
    max_iou = jnp.max(iou, axis=0, keepdims=True)                    # (1, tn)
    max_ref[...] = max_iou

    # validity mask over lanes; padded gt columns are excluded from statistics.
    lane = jax.lax.broadcasted_iota(jnp.int32, (1, tn), 1)
    valid_b = (off + lane) < nvalid_ref[0]
    valid_f = valid_b.astype(jnp.float32)
    safe_max = jnp.where(valid_b, max_iou, 0.0)                      # (1, tn)

    sum_vec[...] += safe_max

    # 50-bin histogram of floor(max_iou / 0.02), bin 50 folded into 49.
    # Accumulate the (56, tn) one-hot; the XLU lane-reduce happens only at finalize.
    bin_idx = jnp.minimum(jnp.floor(safe_max / BIN_WIDTH).astype(jnp.int32),
                          NUM_BINS - 1)                              # (1, tn)
    bins_col = jax.lax.broadcasted_iota(jnp.int32, (BIN_SUB, 1), 0)  # (56, 1)
    hist_acc[...] += jnp.where(bins_col == bin_idx, valid_f, 0.0)    # (56, tn)

    @pl.when(i == n_inner - 1)
    def _finalize():
        # IoU sum for this outer chunk (f32 accumulation: exact to 2^24 counts).
        sum_ref[...] = jnp.sum(sum_vec[...], axis=1,
                               keepdims=True).reshape(1, 1, 1)
        # single lane reduce of the resident histogram accumulator, then relayout
        # the (56, 1) column into a (1, 128) lane-dense row written exactly once.
        col = jnp.sum(hist_acc[...], axis=1, keepdims=True)          # (56, 1)
        colb = jnp.broadcast_to(col, (BIN_SUB, NUM_BINS_LANE))
        r = jax.lax.broadcasted_iota(jnp.int32, (BIN_SUB, NUM_BINS_LANE), 0)
        c = jax.lax.broadcasted_iota(jnp.int32, (BIN_SUB, NUM_BINS_LANE), 1)
        row = jnp.sum(jnp.where(r == c, colb, 0.0), axis=0, keepdims=True)
        hist_ref[...] = row.astype(jnp.int32).reshape(1, 1, NUM_BINS_LANE)


def _round_up(x, m):
    return -(-x // m) * m


def _choose_lane_tile(num_gt, p, target_block_bytes=4 << 20, max_lanes=8192):
    """Lane tile (multiple of 128) sized by a ~4 MiB pseudo-block byte budget
    (double-buffered -> ~8 MiB) and an 8192-lane cap; padding waste is bounded
    to O(128) lanes per tile.  Total VMEM stays well inside the 32 MiB scoped
    limit on all of v5e/v6e/v7x."""
    n128 = _round_up(max(num_gt, 1), 128)
    bytes_per_lane = 4 * max(p, 1) * 4            # 4 coords x P rows x f32
    budget = (target_block_bytes // bytes_per_lane) // 128 * 128
    budget = max(128, min(max_lanes, budget))
    if budget >= n128:
        return n128                               # single tile, <128 lanes padding
    t = -(-n128 // budget)                        # number of tiles at this budget
    return _round_up(-(-n128 // t), 128)


@functools.partial(jax.jit, static_argnums=(3, 4))
def _p2b_iou_pallas(nvalid, p_cm, g_cm, tn, n_outer):
    """nvalid: (1,) i32; p_cm: (4, P, N_pad) f32; g_cm: (4, 1, N_pad) f32."""
    _, p, n_pad = p_cm.shape
    n_tiles = n_pad // tn
    n_inner = n_tiles // n_outer

    # gt stays resident in VMEM (fetched once) unless pathologically large.
    g_resident = (2 * 16 * n_pad) <= (4 << 20)
    if g_resident:
        g_spec = pl.BlockSpec((4, 1, n_pad), lambda o, i, nv: (0, 0, 0))
    else:
        g_spec = pl.BlockSpec((4, 1, tn),
                              lambda o, i, nv: (0, 0, o * n_inner + i))

    grid_spec = pltpu.PrefetchScalarGridSpec(
        num_scalar_prefetch=1,
        grid=(n_outer, n_inner),
        in_specs=[
            pl.BlockSpec((4, p, tn), lambda o, i, nv: (0, 0, o * n_inner + i)),
            g_spec,
        ],
        out_specs=(
            # per-gt max IoU row (lane dense)
            pl.BlockSpec((1, tn), lambda o, i, nv: (0, o * n_inner + i)),
            # per-outer-chunk partial IoU sum (resident across the inner axis)
            pl.BlockSpec((1, 1, 1), lambda o, i, nv: (o, 0, 0)),
            # per-outer-chunk partial histogram row
            pl.BlockSpec((1, 1, NUM_BINS_LANE), lambda o, i, nv: (o, 0, 0)),
        ),
        scratch_shapes=[
            pltpu.VMEM((BIN_SUB, tn), jnp.float32),   # histogram accumulator
            pltpu.VMEM((1, tn), jnp.float32),         # per-lane sum accumulator
        ],
    )
    return pl.pallas_call(
        functools.partial(_iou_kernel, g_resident=g_resident),
        out_shape=(
            jax.ShapeDtypeStruct((1, n_pad), jnp.float32),             # max IoU
            jax.ShapeDtypeStruct((n_outer, 1, 1), jnp.float32),        # sum parts
            jax.ShapeDtypeStruct((n_outer, 1, NUM_BINS_LANE), jnp.int32),
        ),
        grid_spec=grid_spec,
        compiler_params=pltpu.CompilerParams(
            dimension_semantics=("parallel", "arbitrary"),
            vmem_limit_bytes=32 * 1024 * 1024),
    )(nvalid, p_cm, g_cm)


class TestP2BIoU:
    """JAX/Pallas port of Test_P2B_iou (stateful running IoU statistics)."""

    def __init__(self, dim_in=256, tile=None):
        self.sum_iou = jnp.zeros((), jnp.float32)
        self.sum_num = 0
        self.iou_bin = jnp.zeros((NUM_BINS,), jnp.int32)
        self._tile = tile          # optional lane-tile override (testing/tuning)

    def forward(self, pseudo_boxes, gt_bboxes, mode='best_proposal_iou'):
        gt = jnp.concatenate(gt_bboxes, axis=0).astype(jnp.float32)      # (N, 4)
        num_gt = gt.shape[0]
        pb = jnp.concatenate(pseudo_boxes, axis=0).astype(jnp.float32)
        pb = pb.reshape(num_gt, -1, 4)                                   # (N, P, 4)
        p = pb.shape[1]

        tn = self._tile if self._tile is not None else _choose_lane_tile(num_gt, p)
        n_pad = _round_up(num_gt, tn)

        # glue: coordinate-major layout with gt on lanes.
        # TODO(synk): produce this (4, P, N) layout upstream; the transpose is a
        # full HBM read+rewrite of the payload and dominates for small num_gt.
        p_cm = jnp.transpose(pb, (2, 1, 0))                              # (4, P, N)
        g_cm = jnp.transpose(gt, (1, 0))[:, None, :]                     # (4, 1, N)
        if n_pad != num_gt:
            pad = n_pad - num_gt
            p_cm = jnp.pad(p_cm, ((0, 0), (0, 0), (0, pad)))
            g_cm = jnp.pad(g_cm, ((0, 0), (0, 0), (0, pad)))

        n_tiles = n_pad // tn
        n_outer = 2 if (n_tiles >= 2 and n_tiles % 2 == 0) else 1        # v7x 2-TC split

        nvalid = jnp.array([num_gt], jnp.int32)
        max_row, sum_part, hist_part = _p2b_iou_pallas(nvalid, p_cm, g_cm, tn, n_outer)

        # running-state updates (the python for-loop / sums of the original)
        self.sum_iou = self.sum_iou + jnp.sum(sum_part)
        self.sum_num = self.sum_num + num_gt
        self.iou_bin = self.iou_bin + jnp.sum(hist_part, axis=(0, 1))[:NUM_BINS]
        # TODO(synk): original module prints iou_bin and sum_iou/sum_num here.
        return max_row[0, :num_gt]


def _make_boxes(key, n):
    k1, k2, k3, k4 = jax.random.split(key, 4)
    cx = jax.random.uniform(k1, (n,), minval=10.0, maxval=90.0)
    cy = jax.random.uniform(k2, (n,), minval=10.0, maxval=90.0)
    w = jax.random.uniform(k3, (n,), minval=5.0, maxval=30.0)
    h = jax.random.uniform(k4, (n,), minval=5.0, maxval=30.0)
    return jnp.stack([cx - w / 2, cy - h / 2, cx + w / 2, cy + h / 2], axis=-1)


def _reference(pb, gt):
    """Pure-jnp reference of aligned IoU + per-gt max."""
    g = gt[:, None, :]
    lt = jnp.maximum(pb[..., :2], g[..., :2])
    rb = jnp.minimum(pb[..., 2:], g[..., 2:])
    wh = jnp.maximum(rb - lt, 0.0)
    overlap = wh[..., 0] * wh[..., 1]
    a1 = (pb[..., 2] - pb[..., 0]) * (pb[..., 3] - pb[..., 1])
    a2 = (g[..., 2] - g[..., 0]) * (g[..., 3] - g[..., 1])
    iou = overlap / jnp.maximum(a1 + a2 - overlap, EPS)
    return jnp.max(iou, axis=1)


def _check_case(name, pseudo_boxes, gt_bboxes, tile=None):
    mod = TestP2BIoU(tile=tile)
    max_iou = mod.forward(pseudo_boxes, gt_bboxes)
    jax.block_until_ready((max_iou, mod.sum_iou, mod.iou_bin))

    gt_all = jnp.concatenate(gt_bboxes, 0).astype(jnp.float32)
    num_gt = gt_all.shape[0]
    pb_all = jnp.concatenate(pseudo_boxes, 0).astype(jnp.float32).reshape(num_gt, -1, 4)
    ref = _reference(pb_all, gt_all)

    assert max_iou.shape == (num_gt,), name
    assert bool(jnp.allclose(max_iou, ref, atol=1e-5)), name
    assert int(jnp.sum(mod.iou_bin)) == num_gt, name
    bins = jnp.clip(jnp.floor(max_iou / BIN_WIDTH).astype(jnp.int32), 0, NUM_BINS - 1)
    ref_hist = jnp.zeros((NUM_BINS,), jnp.int32).at[bins].add(1)
    # tolerate a single ulp-at-bin-boundary flip between kernel and XLA divides
    assert int(jnp.abs(mod.iou_bin - ref_hist).sum()) <= 2, name
    assert bool(jnp.allclose(mod.sum_iou, jnp.sum(ref), rtol=1e-5, atol=1e-3)), name
    assert mod.sum_num == num_gt, name


if __name__ == "__main__":
    key = jax.random.PRNGKey(0)

    # Case 1: small shapes typical of this module (2 imgs x 4 gts, 16 proposals/gt).
    num_imgs, gt_per_img, p1 = 2, 4, 16
    keys = jax.random.split(key, 2 * num_imgs + 2)
    gt_bboxes1 = [_make_boxes(keys[i], gt_per_img) for i in range(num_imgs)]
    pseudo_boxes1 = []
    for i in range(num_imgs):
        base = gt_bboxes1[i][:, None, :]                       # (gt, 1, 4)
        noise = jax.random.uniform(keys[num_imgs + i], (gt_per_img, p1, 4),
                                   minval=-5.0, maxval=5.0)
        pseudo_boxes1.append(base + noise)                     # (gt, P, 4)
    _check_case("case1", pseudo_boxes1, gt_bboxes1)

    # Case 2: exercise multi-tile accumulation, lane-padding masking and the
    # two-outer-chunk partial-output (megacore) path: 500 gts, tile=128 -> 2x2 grid.
    n2, p2 = 500, 8
    gt2 = _make_boxes(keys[-2], n2)
    noise2 = jax.random.uniform(keys[-1], (n2, p2, 4), minval=-5.0, maxval=5.0)
    _check_case("case2", [gt2[:, None, :] + noise2], [gt2], tile=128)

    print("KERNEL_OK")
</pallas_src>

<mosaic_0001>
module attributes {stable_mosaic.version = 11 : i64} {
  func.func @_iou_kernel(%arg0: i32, %arg1: i32, %arg2: memref<1xi32, #tpu.memory_space<smem>>, %arg3: memref<4x16x128xf32, #tpu.memory_space<vmem>>, %arg4: memref<4x1x128xf32, #tpu.memory_space<vmem>>, %arg5: memref<1x128xf32, #tpu.memory_space<vmem>>, %arg6: memref<1x1x1xf32, #tpu.memory_space<vmem>>, %arg7: memref<1x1x128xi32, #tpu.memory_space<vmem>>, %arg8: memref<56x128xf32, #tpu.memory_space<vmem>>, %arg9: memref<1x128xf32, #tpu.memory_space<vmem>>) attributes {dimension_semantics = [#tpu.dimension_semantics<parallel>, #tpu.dimension_semantics<arbitrary>], iteration_bounds = array<i64: 1, 1>, scalar_prefetch = 1 : i64, scratch_operands = 2 : i64, tpu.core_type = #tpu.core_type<tc>, window_params = [{transform_indices = @transform_0, window_bounds = array<i64: 4, 16, 128>}, {pipeline_mode = #tpu.pipeline_mode<synchronous>, transform_indices = @transform_1, window_bounds = array<i64: 4, 1, 128>}, {transform_indices = @transform_2, window_bounds = array<i64: 1, 128>}, {transform_indices = @transform_3, window_bounds = array<i64: 1, 1, 1>}, {transform_indices = @transform_4, window_bounds = array<i64: 1, 1, 128>}]} {
    %c1_i32 = arith.constant 1 : i32
    %0 = arith.muli %arg0, %c1_i32 : i32
    %1 = arith.addi %0, %arg1 : i32
    %c128_i32 = arith.constant 128 : i32
    %2 = arith.muli %1, %c128_i32 : i32
    %3 = tpu.assume_multiple %2, 128 : i32
    %c0_i32 = arith.constant 0 : i32
    %4 = arith.cmpi eq, %arg1, %c0_i32 : i32
    %5 = arith.extui %4 : i1 to i32
    %c0_i32_0 = arith.constant 0 : i32
    %6 = arith.cmpi ne, %5, %c0_i32_0 : i32
    scf.if %6 {
      %cst_36 = arith.constant 0.000000e+00 : f32
      %91 = vector.broadcast %cst_36 : f32 to vector<56x128xf32>
      %c0_37 = arith.constant 0 : index
      %c0_38 = arith.constant 0 : index
      %92 = vector.load %arg8[%c0_37, %c0_38] : memref<56x128xf32, #tpu.memory_space<vmem>>, vector<56x128xf32>
      tpu.vector_store %arg8[%c0_37, %c0_38], %91 {strides = array<i32>} : memref<56x128xf32, #tpu.memory_space<vmem>>, vector<56x128xf32>,
      %cst_39 = arith.constant 0.000000e+00 : f32
      %93 = vector.broadcast %cst_39 : f32 to vector<1x128xf32>
      %c0_40 = arith.constant 0 : index
      %c0_41 = arith.constant 0 : index
      %94 = vector.load %arg9[%c0_40, %c0_41] : memref<1x128xf32, #tpu.memory_space<vmem>>, vector<1x128xf32>
      tpu.vector_store %arg9[%c0_40, %c0_41], %93 {strides = array<i32>} : memref<1x128xf32, #tpu.memory_space<vmem>>, vector<1x128xf32>,
    } else {
    }
    %c0 = arith.constant 0 : index
    %c0_1 = arith.constant 0 : index
    %c0_2 = arith.constant 0 : index
    %7 = vector.load %arg3[%c0, %c0_1, %c0_2] : memref<4x16x128xf32, #tpu.memory_space<vmem>>, vector<1x16x128xf32>
    %8 = vector.shape_cast %7 : vector<1x16x128xf32> to vector<16x128xf32>
    %c1 = arith.constant 1 : index
    %c0_3 = arith.constant 0 : index
    %c0_4 = arith.constant 0 : index
    %9 = vector.load %arg3[%c1, %c0_3, %c0_4] : memref<4x16x128xf32, #tpu.memory_space<vmem>>, vector<1x16x128xf32>
    %10 = vector.shape_cast %9 : vector<1x16x128xf32> to vector<16x128xf32>
    %c2 = arith.constant 2 : index
    %c0_5 = arith.constant 0 : index
    %c0_6 = arith.constant 0 : index
    %11 = vector.load %arg3[%c2, %c0_5, %c0_6] : memref<4x16x128xf32, #tpu.memory_space<vmem>>, vector<1x16x128xf32>
    %12 = vector.shape_cast %11 : vector<1x16x128xf32> to vector<16x128xf32>
    %c3 = arith.constant 3 : index
    %c0_7 = arith.constant 0 : index
    %c0_8 = arith.constant 0 : index
    %13 = vector.load %arg3[%c3, %c0_7, %c0_8] : memref<4x16x128xf32, #tpu.memory_space<vmem>>, vector<1x16x128xf32>
    %14 = vector.shape_cast %13 : vector<1x16x128xf32> to vector<16x128xf32>
    %c0_9 = arith.constant 0 : index
    %c0_10 = arith.constant 0 : index
    %15 = arith.index_cast %3 : i32 to index
    %16 = vector.load %arg4[%c0_9, %c0_10, %15] : memref<4x1x128xf32, #tpu.memory_space<vmem>>, vector<1x1x128xf32>
    %17 = vector.shape_cast %16 : vector<1x1x128xf32> to vector<1x128xf32>
    %c1_11 = arith.constant 1 : index
    %c0_12 = arith.constant 0 : index
    %18 = arith.index_cast %3 : i32 to index
    %19 = vector.load %arg4[%c1_11, %c0_12, %18] : memref<4x1x128xf32, #tpu.memory_space<vmem>>, vector<1x1x128xf32>
    %20 = vector.shape_cast %19 : vector<1x1x128xf32> to vector<1x128xf32>
    %c2_13 = arith.constant 2 : index
    %c0_14 = arith.constant 0 : index
    %21 = arith.index_cast %3 : i32 to index
    %22 = vector.load %arg4[%c2_13, %c0_14, %21] : memref<4x1x128xf32, #tpu.memory_space<vmem>>, vector<1x1x128xf32>
    %23 = vector.shape_cast %22 : vector<1x1x128xf32> to vector<1x128xf32>
    %c3_15 = arith.constant 3 : index
    %c0_16 = arith.constant 0 : index
    %24 = arith.index_cast %3 : i32 to index
    %25 = vector.load %arg4[%c3_15, %c0_16, %24] : memref<4x1x128xf32, #tpu.memory_space<vmem>>, vector<1x1x128xf32>
    %26 = vector.shape_cast %25 : vector<1x1x128xf32> to vector<1x128xf32>
    %27 = vector.broadcast %23 : vector<1x128xf32> to vector<16x128xf32>
    %28 = arith.minimumf %12, %27 : vector<16x128xf32>
    %29 = vector.broadcast %17 : vector<1x128xf32> to vector<16x128xf32>
    %30 = arith.maximumf %8, %29 : vector<16x128xf32>
    %31 = arith.subf %28, %30 : vector<16x128xf32>
    %cst = arith.constant 0.000000e+00 : f32
    %32 = vector.broadcast %cst : f32 to vector<16x128xf32>
    %33 = arith.maximumf %31, %32 : vector<16x128xf32>
    %34 = vector.broadcast %26 : vector<1x128xf32> to vector<16x128xf32>
    %35 = arith.minimumf %14, %34 : vector<16x128xf32>
    %36 = vector.broadcast %20 : vector<1x128xf32> to vector<16x128xf32>
    %37 = arith.maximumf %10, %36 : vector<16x128xf32>
    %38 = arith.subf %35, %37 : vector<16x128xf32>
    %cst_17 = arith.constant 0.000000e+00 : f32
    %39 = vector.broadcast %cst_17 : f32 to vector<16x128xf32>
    %40 = arith.maximumf %38, %39 : vector<16x128xf32>
    %41 = arith.mulf %33, %40 : vector<16x128xf32>
    %42 = arith.subf %12, %8 : vector<16x128xf32>
    %43 = arith.subf %14, %10 : vector<16x128xf32>
    %44 = arith.mulf %42, %43 : vector<16x128xf32>
    %45 = arith.subf %23, %17 : vector<1x128xf32>
    %46 = arith.subf %26, %20 : vector<1x128xf32>
    %47 = arith.mulf %45, %46 : vector<1x128xf32>
    %48 = vector.broadcast %47 : vector<1x128xf32> to vector<16x128xf32>
    %49 = arith.addf %44, %48 : vector<16x128xf32>
    %50 = arith.subf %49, %41 : vector<16x128xf32>
    %cst_18 = arith.constant 9.99999997E-7 : f32
    %51 = vector.broadcast %cst_18 : f32 to vector<16x128xf32>
    %52 = arith.maximumf %50, %51 : vector<16x128xf32>
    %53 = tpu.reciprocal %52 : vector<16x128xf32> -> vector<16x128xf32>
    %54 = arith.mulf %41, %53 : vector<16x128xf32>
    %cst_19 = arith.constant dense<0xFF800000> : vector<128xf32>
    %55 = vector.multi_reduction <maximumf>, %54, %cst_19 [0] : vector<16x128xf32> to vector<128xf32>
    %56 = vector.shape_cast %55 : vector<128xf32> to vector<1x128xf32>
    %c0_20 = arith.constant 0 : index
    %c0_21 = arith.constant 0 : index
    %57 = vector.load %arg5[%c0_20, %c0_21] : memref<1x128xf32, #tpu.memory_space<vmem>>, vector<1x128xf32>
    tpu.vector_store %arg5[%c0_20, %c0_21], %56 {strides = array<i32>} : memref<1x128xf32, #tpu.memory_space<vmem>>, vector<1x128xf32>,
    %58 = tpu.iota {dimensions = array<i32: 1>} : vector<1x128xi32>
    %59 = vector.broadcast %3 : i32 to vector<1x128xi32>
    %60 = arith.addi %59, %58 : vector<1x128xi32>
    %c0_22 = arith.constant 0 : index
    %61 = memref.load %arg2[%c0_22] : memref<1xi32, #tpu.memory_space<smem>>
    %62 = vector.broadcast %61 : i32 to vector<1x128xi32>
    %63 = arith.cmpi slt, %60, %62 : vector<1x128xi32>
    %64 = arith.extui %63 : vector<1x128xi1> to vector<1x128xi32>
    %65 = arith.sitofp %64 : vector<1x128xi32> to vector<1x128xf32>
    %cst_23 = arith.constant 0.000000e+00 : f32
    %66 = vector.broadcast %cst_23 : f32 to vector<1x128xf32>
    %67 = arith.select %63, %56, %66 : vector<1x128xi1>, vector<1x128xf32>
    %c0_24 = arith.constant 0 : index
    %c0_25 = arith.constant 0 : index
    %68 = vector.load %arg9[%c0_24, %c0_25] : memref<1x128xf32, #tpu.memory_space<vmem>>, vector<1x128xf32>
    %69 = arith.addf %68, %67 : vector<1x128xf32>
    %c0_26 = arith.constant 0 : index
    %c0_27 = arith.constant 0 : index
    %70 = vector.load %arg9[%c0_26, %c0_27] : memref<1x128xf32, #tpu.memory_space<vmem>>, vector<1x128xf32>
    tpu.vector_store %arg9[%c0_26, %c0_27], %69 {strides = array<i32>} : memref<1x128xf32, #tpu.memory_space<vmem>>, vector<1x128xf32>,
    %cst_28 = arith.constant 2.000000e-02 : f32
    %71 = vector.broadcast %cst_28 : f32 to vector<1x128xf32>
    %72 = arith.divf %67, %71 : vector<1x128xf32>
    %73 = math.floor %72 : vector<1x128xf32>
    %74 = arith.fptosi %73 : vector<1x128xf32> to vector<1x128xi32>
    %c49_i32 = arith.constant 49 : i32
    %75 = vector.broadcast %c49_i32 : i32 to vector<1x128xi32>
    %76 = arith.minsi %74, %75 : vector<1x128xi32>
    %77 = tpu.iota {dimensions = array<i32: 0>} : vector<56x1xi32>
    %c0_29 = arith.constant 0 : index
    %c0_30 = arith.constant 0 : index
    %78 = vector.load %arg8[%c0_29, %c0_30] : memref<56x128xf32, #tpu.memory_space<vmem>>, vector<56x128xf32>
    %79 = vector.broadcast %77 : vector<56x1xi32> to vector<56x128xi32>
    %80 = vector.broadcast %76 : vector<1x128xi32> to vector<56x128xi32>
    %81 = arith.cmpi eq, %79, %80 : vector<56x128xi32>
    %cst_31 = arith.constant 0.000000e+00 : f32
    %82 = vector.shape_cast %65 : vector<1x128xf32> to vector<1x128xf32>
    %83 = vector.broadcast %82 : vector<1x128xf32> to vector<56x128xf32>
    %84 = vector.broadcast %cst_31 : f32 to vector<56x128xf32>
    %85 = arith.select %81, %83, %84 : vector<56x128xi1>, vector<56x128xf32>
    %86 = arith.addf %78, %85 : vector<56x128xf32>
    %c0_32 = arith.constant 0 : index
    %c0_33 = arith.constant 0 : index
    %87 = vector.load %arg8[%c0_32, %c0_33] : memref<56x128xf32, #tpu.memory_space<vmem>>, vector<56x128xf32>
    tpu.vector_store %arg8[%c0_32, %c0_33], %86 {strides = array<i32>} : memref<56x128xf32, #tpu.memory_space<vmem>>, vector<56x128xf32>,
    %c0_i32_34 = arith.constant 0 : i32
    %88 = arith.cmpi eq, %arg1, %c0_i32_34 : i32
    %89 = arith.extui %88 : i1 to i32
    %c0_i32_35 = arith.constant 0 : i32
    %90 = arith.cmpi ne, %89, %c0_i32_35 : i32
    scf.if %90 {
      %c0_36 = arith.constant 0 : index
      %c0_37 = arith.constant 0 : index
      %91 = vector.load %arg9[%c0_36, %c0_37] : memref<1x128xf32, #tpu.memory_space<vmem>>, vector<1x128xf32>
      %cst_38 = arith.constant dense<0.000000e+00> : vector<1xf32>
      %92 = vector.multi_reduction <add>, %91, %cst_38 [1] : vector<1x128xf32> to vector<1xf32>
      %93 = vector.shape_cast %92 : vector<1xf32> to vector<1x1xf32>
      %94 = vector.shape_cast %93 : vector<1x1xf32> to vector<1x1x1xf32>
      %c0_39 = arith.constant 0 : index
      %c0_40 = arith.constant 0 : index
      %c0_41 = arith.constant 0 : index
      %95 = vector.load %arg6[%c0_39, %c0_40, %c0_41] : memref<1x1x1xf32, #tpu.memory_space<vmem>>, vector<1x1x1xf32>
      tpu.vector_store %arg6[%c0_39, %c0_40, %c0_41], %94 {strides = array<i32>} : memref<1x1x1xf32, #tpu.memory_space<vmem>>, vector<1x1x1xf32>,
      %c0_42 = arith.constant 0 : index
      %c0_43 = arith.constant 0 : index
      %96 = vector.load %arg8[%c0_42, %c0_43] : memref<56x128xf32, #tpu.memory_space<vmem>>, vector<56x128xf32>
      %cst_44 = arith.constant dense<0.000000e+00> : vector<56xf32>
      %97 = vector.multi_reduction <add>, %96, %cst_44 [1] : vector<56x128xf32> to vector<56xf32>
      %98 = vector.shape_cast %97 : vector<56xf32> to vector<56x1xf32>
      %99 = vector.shape_cast %98 : vector<56x1xf32> to vector<56x1xf32>
      %100 = vector.broadcast %99 : vector<56x1xf32> to vector<56x128xf32>
      %101 = tpu.iota {dimensions = array<i32: 0>} : vector<56x128xi32>
      %102 = tpu.iota {dimensions = array<i32: 1>} : vector<56x128xi32>
      %103 = arith.cmpi eq, %101, %102 : vector<56x128xi32>
      %cst_45 = arith.constant 0.000000e+00 : f32
      %104 = vector.broadcast %cst_45 : f32 to vector<56x128xf32>
      %105 = arith.select %103, %100, %104 : vector<56x128xi1>, vector<56x128xf32>
      %cst_46 = arith.constant dense<0.000000e+00> : vector<128xf32>
      %106 = vector.multi_reduction <add>, %105, %cst_46 [0] : vector<56x128xf32> to vector<128xf32>
      %107 = vector.shape_cast %106 : vector<128xf32> to vector<1x128xf32>
      %108 = arith.fptosi %107 : vector<1x128xf32> to vector<1x128xi32>
      %109 = vector.shape_cast %108 : vector<1x128xi32> to vector<1x1x128xi32>
      %c0_47 = arith.constant 0 : index
      %c0_48 = arith.constant 0 : index
      %c0_49 = arith.constant 0 : index
      %110 = vector.load %arg7[%c0_47, %c0_48, %c0_49] : memref<1x1x128xi32, #tpu.memory_space<vmem>>, vector<1x1x128xi32>
      tpu.vector_store %arg7[%c0_47, %c0_48, %c0_49], %109 {strides = array<i32>} : memref<1x1x128xi32, #tpu.memory_space<vmem>>, vector<1x1x128xi32>,
    } else {
    }
    return
  }
  func.func @transform_0(%arg0: i32, %arg1: i32, %arg2: memref<1xi32, #tpu.memory_space<smem>>) -> (i32, i32, i32) {
    %c1_i32 = arith.constant 1 : i32
    %0 = arith.muli %arg0, %c1_i32 : i32
    %1 = arith.addi %0, %arg1 : i32
    %c0_i32 = arith.constant 0 : i32
    %c0_i32_0 = arith.constant 0 : i32
    %c0_i32_1 = arith.constant 0 : i32
    return %c0_i32, %c0_i32_0, %1 : i32, i32, i32
  }
  func.func @transform_1(%arg0: i32, %arg1: i32, %arg2: memref<1xi32, #tpu.memory_space<smem>>) -> (i32, i32, i32) {
    %c0_i32 = arith.constant 0 : i32
    %c0_i32_0 = arith.constant 0 : i32
    %c0_i32_1 = arith.constant 0 : i32
    %c0_i32_2 = arith.constant 0 : i32
    return %c0_i32, %c0_i32_0, %c0_i32_1 : i32, i32, i32
  }
  func.func @transform_2(%arg0: i32, %arg1: i32, %arg2: memref<1xi32, #tpu.memory_space<smem>>) -> (i32, i32) {
    %c1_i32 = arith.constant 1 : i32
    %0 = arith.muli %arg0, %c1_i32 : i32
    %1 = arith.addi %0, %arg1 : i32
    %c0_i32 = arith.constant 0 : i32
    %c0_i32_0 = arith.constant 0 : i32
    return %c0_i32, %1 : i32, i32
  }
  func.func @transform_3(%arg0: i32, %arg1: i32, %arg2: memref<1xi32, #tpu.memory_space<smem>>) -> (i32, i32, i32) {
    %c0_i32 = arith.constant 0 : i32
    %c0_i32_0 = arith.constant 0 : i32
    %c0_i32_1 = arith.constant 0 : i32
    return %arg0, %c0_i32, %c0_i32_0 : i32, i32, i32
  }
  func.func @transform_4(%arg0: i32, %arg1: i32, %arg2: memref<1xi32, #tpu.memory_space<smem>>) -> (i32, i32, i32) {
    %c0_i32 = arith.constant 0 : i32
    %c0_i32_0 = arith.constant 0 : i32
    %c0_i32_1 = arith.constant 0 : i32
    return %arg0, %c0_i32, %c0_i32_0 : i32, i32, i32
  }
}

</mosaic_0001>

<llo_original>
// kernel: _p2b_iou_pallas.1
$region0: #{_p2b_iou_pallas.1}
  #allocation0 [shape = 'u32[]', space=smem, size = 0x4, offset = 0x4, fixed_abs, tag = 'smem constant byte address 0x4 - core index']
  #allocation1 [shape = 'u32[72,128]{1,0:T(1,128)}', space=vmem, size = 0x9000, scoped, tag = 'internal scratch']
  #allocation2 [shape = 'f32[56,128]{1,0:T(8,128)}', space=vmem, size = 0x7000, scoped, tag = 'scratch operand']
  #allocation3 [shape = 'f32[1,128]{1,0:T(1,128)}', space=vmem, size = 0x200, scoped, tag = 'scratch operand']
  #allocation4 [shape = 's32[1]{0}', space=sflag, size = 0x4, scoped, tag = 'scoped memory for _p2b_iou_pallas.1']
  #allocation5 [shape = 's32[1]{0:T(128)S(6)}', space=smem, size = 0x200, scoped, tag = 'prefetched SMEM operand 0']
  %s0 = inlined_call_operand.<no memory space> [shape: s32[1], index: 0, kind: input, shape index: {}]
  %s1 = inlined_call_operand.hbm [shape: f32[4,16,128], index: 1, kind: input, shape index: {}]
  %s2 = inlined_call_operand.hbm [shape: f32[4,1,128], index: 2, kind: input, shape index: {}]
  %s3 = inlined_call_operand.hbm [shape: f32[1,128], index: 3, kind: output, shape index: {0}]
  %s4 = inlined_call_operand.hbm [shape: f32[1,1,1], index: 4, kind: output, shape index: {1}]
  %s5 = inlined_call_operand.hbm [shape: s32[1,1,128], index: 5, kind: output, shape index: {2}]
  %6 = xla_tuple %s3, %s4, %s5
  %s7 = sld [smem:[#allocation0]]
  $region50: #{_p2b_iou_pallas.1} parent=0
    _
  %s9 = ssub.s32 1, %s7
  %s10 = scalar_select 0, %s9, %s7
  %11 = sst [smem:[#allocation5]] %s0
  $region1: #{_p2b_iou_pallas.1} parent=0
    #allocation6 [shape = 'u8[32768]{0}', space=vmem, size = 0x8000, scoped, tag = 'input window, operand 1, single buffered']
    #allocation7 [shape = 's32[1]{0}', space=sflag, size = 0x4, scoped, tag = 'scoped memory for _p2b_iou_pallas.1']
    #allocation8 [shape = 's32[1]{0}', space=sflag, size = 0x4, scoped, tag = 'scoped memory for _p2b_iou_pallas.1']
    #allocation9 [shape = 'u8[2048]{0}', space=vmem, size = 0x800, scoped, tag = 'input window, operand 2, single buffered']
    #allocation10 [shape = 's32[1]{0}', space=sflag, size = 0x4, scoped, tag = 'scoped memory for _p2b_iou_pallas.1']
    #allocation11 [shape = 'u8[512]{0}', space=vmem, size = 0x400, scoped, tag = 'output window, operand 0, single buffered']
    #allocation12 [shape = 'u8[512]{0}', space=vmem, size = 0x400, scoped, tag = 'output window, operand 1, single buffered']
    #allocation13 [shape = 's32[1]{0}', space=sflag, size = 0x4, scoped, tag = 'scoped memory for _p2b_iou_pallas.1']
    #allocation14 [shape = 'u8[512]{0}', space=vmem, size = 0x400, scoped, tag = 'output window, operand 2, single buffered']
    %12 = vsyncpa [#allocation7], 0
    %13 = vsyncpa [#allocation10], 0
    %14 = vsyncpa [#allocation8], 0
    %15 = vsyncpa [#allocation13], 0
    // Predicated region
    $region2: #{_p2b_iou_pallas.1} parent=1 // pred_check
      _
    $region3: #{_p2b_iou_pallas.1} parent=1 // pred_check_branch
      %17 = sbr.rel (0) target = $region5
    $region4: #{_p2b_iou_pallas.1} parent=1 // pred_region
      %s18 = sadd.s32 0, 0
      %20 = vsyncadd [#allocation7], 0
      %s21 = smul.addr %s18, 8
      %s22 = scalar_lea.hbm %s1, %s21
      %s23 = sshll.u32 %s22, 4
      %s24 = int_to_ptr.hbm [resolvable:$true] %s23
      %s25 = sshll.u32 [#allocation6], 4
      %s26 = int_to_ptr.vmem [resolvable:$true] %s25
      %31 = dma.hbm_to_vmem [thread:$0]  %s24, 1024, %s26, [#allocation7], 128, 128, 8
    $region5: #{_p2b_iou_pallas.1} parent=1 // pred_fallthru
      _
    // Predicated region
    $region6: #{_p2b_iou_pallas.1} parent=1 // pred_check
      _
    $region7: #{_p2b_iou_pallas.1} parent=1 // pred_check_branch
      %33 = sbr.rel (0) target = $region9
    $region8: #{_p2b_iou_pallas.1} parent=1 // pred_region
      %35 = vsyncadd [#allocation10], 0
      %s36 = sshll.u32 %s2, 4
      %s37 = int_to_ptr.hbm [resolvable:$true] %s36
      %s38 = sshll.u32 [#allocation9], 4
      %s39 = int_to_ptr.vmem [resolvable:$true] %s38
      %44 = dma.hbm_to_vmem [thread:$0]  %s37, 64, %s39, [#allocation10], 16, 16, 1
    $region9: #{_p2b_iou_pallas.1} parent=1 // pred_fallthru
      _
    // Predicated region
    $region10: #{_p2b_iou_pallas.1} parent=1 // pred_check
      _
    $region11: #{_p2b_iou_pallas.1} parent=1 // pred_check_branch
      %46 = sbr.rel (0) target = $region13
    $region12: #{_p2b_iou_pallas.1} parent=1 // pred_region
      %48 = dma.done [#allocation7], 1024
    $region13: #{_p2b_iou_pallas.1} parent=1 // pred_fallthru
      _
    // Predicated region
    $region14: #{_p2b_iou_pallas.1} parent=1 // pred_check
      _
    $region15: #{_p2b_iou_pallas.1} parent=1 // pred_check_branch
      %50 = sbr.rel (0) target = $region17
    $region16: #{_p2b_iou_pallas.1} parent=1 // pred_region
      %52 = dma.done [#allocation10], 64
    $region17: #{_p2b_iou_pallas.1} parent=1 // pred_fallthru
      _
    %s53 = sadd.s32 0, 0
    %s54 = sadd.s32 0, 0
    %s55 = sadd.s32 0, 0
    %s56 = smul.u32 %s55, 128
    %p57 = scmp.eq.s32.totalorder 0, 0
    // Predicated region
    $region18: #{_p2b_iou_pallas.1} parent=1 // pred_check
      %p58 = pneg %p57
    $region19: #{_p2b_iou_pallas.1} parent=1 // pred_check_branch
      %60 = sbr.rel (%p58) target = $region21
    $region20: #{_p2b_iou_pallas.1} parent=1 // pred_region
      %61 = vst [vmem:[#allocation2] sm:$0xff] 0.0
      %62 = vst [vmem:[#allocation2 + $0x8] sm:$0xff] 0.0
      %63 = vst [vmem:[#allocation2 + $0x10] sm:$0xff] 0.0
      %64 = vst [vmem:[#allocation2 + $0x18] sm:$0xff] 0.0
      %65 = vst [vmem:[#allocation2 + $0x20] sm:$0xff] 0.0
      %66 = vst [vmem:[#allocation2 + $0x28] sm:$0xff] 0.0
      %67 = vst [vmem:[#allocation2 + $0x30] sm:$0xff] 0.0
      %68 = vst [vmem:[#allocation3] sm:$0x1] 0.0
    $region21: #{_p2b_iou_pallas.1} parent=1 // pred_fallthru
      _
    %v69 = vld [vmem:[#allocation6] sm:$0xff]
    %v70 = vld [vmem:[#allocation6 + $0x8] sm:$0xff]
    %s71 = scalar_lea.vmem [#allocation6], 16
    %v72 = vld [vmem:[%s71] sm:$0xff]
    %v73 = vld [vmem:[%s71 + $0x8] sm:$0xff]
    %s74 = scalar_lea.vmem [#allocation6], 32
    %v75 = vld [vmem:[%s74] sm:$0xff]
    %v76 = vld [vmem:[%s74 + $0x8] sm:$0xff]
    %s77 = scalar_lea.vmem [#allocation6], 48
    %v78 = vld [vmem:[%s77] sm:$0xff]
    %v79 = vld [vmem:[%s77 + $0x8] sm:$0xff]
    %s80 = sshra.s32 %s56, 7
    %s81 = sand.u32 %s56, 127
    %s82 = scalar_lea.vmem [#allocation9], %s80
    %v83 = vld [vmem:[%s82] sm:$0x1]
    %s84 = sadd.s32 %s80, 1
    %s85 = scalar_lea.vmem [#allocation9], %s84
    %v86 = vld [vmem:[%s85] sm:$0x1]
    %s87 = sadd.s32 %s80, 2
    %s88 = scalar_lea.vmem [#allocation9], %s87
    %v89 = vld [vmem:[%s88] sm:$0x1]
    %s90 = sadd.s32 %s80, 3
    %s91 = scalar_lea.vmem [#allocation9], %s90
    %v92 = vld [vmem:[%s91] sm:$0x1]
    %v94 = vperm.slane %v89, 0
    %v96 = vmin.f32 %v75, %v94
    %v97 = vmin.f32 %v76, %v94
    %v99 = vperm.slane %v83, 0
    %v101 = vmax.f32 %v69, %v99
    %v102 = vmax.f32 %v70, %v99
    %v103 = vsub.f32 %v96, %v101
    %v104 = vsub.f32 %v97, %v102
    %v105 = vmax.f32 %v103, 0.0
    %v106 = vmax.f32 %v104, 0.0
    %v108 = vperm.slane %v92, 0
    %v110 = vmin.f32 %v78, %v108
    %v111 = vmin.f32 %v79, %v108
    %v113 = vperm.slane %v86, 0
    %v115 = vmax.f32 %v72, %v113
    %v116 = vmax.f32 %v73, %v113
    %v117 = vsub.f32 %v110, %v115
    %v118 = vsub.f32 %v111, %v116
    %v119 = vmax.f32 %v117, 0.0
    %v120 = vmax.f32 %v118, 0.0
    %v121 = vmul.f32 %v105, %v119
    %v122 = vmul.f32 %v106, %v120
    %v123 = vsub.f32 %v75, %v69
    %v124 = vsub.f32 %v76, %v70
    %v125 = vsub.f32 %v78, %v72
    %v126 = vsub.f32 %v79, %v73
    %v127 = vmul.f32 %v123, %v125
    %v128 = vmul.f32 %v124, %v126
    %v129 = vsub.f32 %v89, %v83
    %v130 = vsub.f32 %v92, %v86
    %v131 = vmul.f32 %v129, %v130
    %v133 = vperm.slane %v131, 0
    %v135 = vadd.f32 %v127, %v133
    %v136 = vadd.f32 %v128, %v133
    %v137 = vsub.f32 %v135, %v121
    %v138 = vsub.f32 %v136, %v122
    %v139 = vmax.f32 %v137, 1e-06
    %v140 = vmax.f32 %v138, 1e-06
    %v141 = vrcp.pop %v139
    %v142 = vmul.f32 %v139, %v141
    %v143 = vsub.f32 1.0, %v142
    %v144 = vmul.f32 %v141, %v143
    %v145 = vadd.f32 %v141, %v144
    %vm146 = vweird.f32 %v139
    %vm147 = vweird.f32 %v141
    %vm148 = vmor %vm146, %vm147
    %v149 = vsel %vm148, %v141, %v145
    %v150 = vand.u32 2147483647, %v139
    %vm151 = vcmp.eq.f32.partialorder %v150, 8.507059e+37
    %v152 = vand.u32 %v139, 2147483648
    %v153 = vor.u32 1.1754944e-38, %v152
    %v154 = vsel %vm151, %v153, %v149
    %v155 = vrcp.pop %v140
    %v156 = vmul.f32 %v140, %v155
    %v157 = vsub.f32 1.0, %v156
    %v158 = vmul.f32 %v155, %v157
    %v159 = vadd.f32 %v155, %v158
    %vm160 = vweird.f32 %v140
    %vm161 = vweird.f32 %v155
    %vm162 = vmor %vm160, %vm161
    %v163 = vsel %vm162, %v155, %v159
    %v164 = vand.u32 2147483647, %v140
    %vm165 = vcmp.eq.f32.partialorder %v164, 8.507059e+37
    %v166 = vand.u32 %v140, 2147483648
    %v167 = vor.u32 1.1754944e-38, %v166
    %v168 = vsel %vm165, %v167, %v163
    %v169 = vmul.f32 %v121, %v154
    %v170 = vmul.f32 %v122, %v168
    %v171 = vmax.f32 %v169, %v170
    %v172 = vrot.slane %v171, 4
    %v173 = vmax.f32 %v171, %v172
    %v174 = vrot.slane %v173, 2
    %v175 = vmax.f32 %v173, %v174
    %v176 = vrot.slane %v175, 1
    %v177 = vmax.f32 %v175, %v176
    %178 = vst [vmem:[#allocation11] sm:$0x1] %v177
    %v179 = vlaneseq
    %v180 = vand.u32 %v179, 127
    %v181 = vstv %s56
    %v182 = vadd.s32 %v181, %v180
    %s183 = sld [smem:[#allocation5]]
    %v184 = vstv %s183
    %vm185 = vcmp.lt.s32.totalorder %v182, %v184
    %v186 = vsel %vm185, 1, 0
    %v187 = vcvt.s32.f32 %v186
    %v188 = vsel %vm185, %v177, 0.0
    %v189 = vld [vmem:[#allocation3] sm:$0x1]
    %v190 = vadd.f32 %v189, %v188
    %191 = vst [vmem:[#allocation3] sm:$0x1] %v190
    %v192 = vrcp.pop 0.02
    %v193 = vmul.f32 0.02, %v192
    %v194 = vsub.f32 1.0, %v193
    %v195 = vmul.f32 %v192, %v194
    %v196 = vadd.f32 %v192, %v195
    %vm197 = vweird.f32 %v192
    %v198 = vsel %vm197, %v192, %v196
    %v199 = vmul.f32 %v188, %v198
    %v200 = vfloor.f32 %v199
    %v201 = vcvt.f32.s32.to.zero.pseudo %v200
    %vm202 = vcmp.lt.s32.totalorder %v201, 49
    %v203 = vsel %vm202, %v201, 49
    %v204 = vlaneseq
    %v205 = vshrl.u32 %v204, 7
    %v206 = vadd.s32 %v205, 8
    %v207 = vadd.s32 %v205, 16
    %v208 = vadd.s32 %v205, 24
    %v209 = vadd.s32 %v205, 32
    %v210 = vadd.s32 %v205, 40
    %v211 = vadd.s32 %v205, 48
    %v212 = vld [vmem:[#allocation2] sm:$0xff]
    %v213 = vld [vmem:[#allocation2 + $0x8] sm:$0xff]
    %v214 = vld [vmem:[#allocation2 + $0x10] sm:$0xff]
    %v215 = vld [vmem:[#allocation2 + $0x18] sm:$0xff]
    %v216 = vld [vmem:[#allocation2 + $0x20] sm:$0xff]
    %v217 = vld [vmem:[#allocation2 + $0x28] sm:$0xff]
    %v218 = vld [vmem:[#allocation2 + $0x30] sm:$0xff]
    %vm219 = vcmp.eq.s32.totalorder %v205, %v203
    %vm220 = vcmp.eq.s32.totalorder %v206, %v203
    %vm221 = vcmp.eq.s32.totalorder %v207, %v203
    %vm222 = vcmp.eq.s32.totalorder %v208, %v203
    %vm223 = vcmp.eq.s32.totalorder %v209, %v203
    %vm224 = vcmp.eq.s32.totalorder %v210, %v203
    %vm225 = vcmp.eq.s32.totalorder %v211, %v203
    %v226 = vsel %vm219, %v187, 0.0
    %v227 = vsel %vm220, %v187, 0.0
    %v228 = vsel %vm221, %v187, 0.0
    %v229 = vsel %vm222, %v187, 0.0
    %v230 = vsel %vm223, %v187, 0.0
    %v231 = vsel %vm224, %v187, 0.0
    %v232 = vsel %vm225, %v187, 0.0
    %v233 = vadd.f32 %v212, %v226
    %v234 = vadd.f32 %v213, %v227
    %v235 = vadd.f32 %v214, %v228
    %v236 = vadd.f32 %v215, %v229
    %v237 = vadd.f32 %v216, %v230
    %v238 = vadd.f32 %v217, %v231
    %v239 = vadd.f32 %v218, %v232
    %240 = vst [vmem:[#allocation2] sm:$0xff] %v233
    %241 = vst [vmem:[#allocation2 + $0x8] sm:$0xff] %v234
    %242 = vst [vmem:[#allocation2 + $0x10] sm:$0xff] %v235
    %243 = vst [vmem:[#allocation2 + $0x18] sm:$0xff] %v236
    %244 = vst [vmem:[#allocation2 + $0x20] sm:$0xff] %v237
    %245 = vst [vmem:[#allocation2 + $0x28] sm:$0xff] %v238
    %246 = vst [vmem:[#allocation2 + $0x30] sm:$0xff] %v239
    // Predicated region
    $region22: #{_p2b_iou_pallas.1} parent=1 // pred_check
      %p247 = pneg %p57
    $region23: #{_p2b_iou_pallas.1} parent=1 // pred_check_branch
      %249 = sbr.rel (%p247) target = $region25
    $region24: #{_p2b_iou_pallas.1} parent=1 // pred_region
      %v250 = vld [vmem:[#allocation3] sm:$0x1]
      %vm251 = vcmask 1040384
      %v252 = vsel %vm251, %v250, 0.0
      %253 = vadd.xlane.f32.xlu0 %v252
      %v254 = vpop.xlane.xlu0 %253
      %vm255 = vcmask 0
      %256 = vst.msk [vmem:[#allocation12] sm:$0x1] %vm255, %v254
      %v257 = vld [vmem:[#allocation2] sm:$0xff]
      %v258 = vld [vmem:[#allocation2 + $0x8] sm:$0xff]
      %v259 = vld [vmem:[#allocation2 + $0x10] sm:$0xff]
      %v260 = vld [vmem:[#allocation2 + $0x18] sm:$0xff]
      %v261 = vld [vmem:[#allocation2 + $0x20] sm:$0xff]
      %v262 = vld [vmem:[#allocation2 + $0x28] sm:$0xff]
      %v263 = vld [vmem:[#allocation2 + $0x30] sm:$0xff]
      %264 = vadd.xlane.f32.xlu0 %v257
      %v265 = vpop.xlane.xlu0 %264
      %266 = vadd.xlane.f32.xlu0 %v258
      %v267 = vpop.xlane.xlu0 %266
      %268 = vadd.xlane.f32.xlu0 %v259
      %v269 = vpop.xlane.xlu0 %268
      %270 = vadd.xlane.f32.xlu0 %v260
      %v271 = vpop.xlane.xlu0 %270
      %272 = vadd.xlane.f32.xlu0 %v261
      %v273 = vpop.xlane.xlu0 %272
      %274 = vadd.xlane.f32.xlu0 %v262
      %v275 = vpop.xlane.xlu0 %274
      %276 = vadd.xlane.f32.xlu0 %v263
      %v277 = vpop.xlane.xlu0 %276
      %vm278 = vcmp.eq.s32.totalorder %v205, %v180
      %vm279 = vcmp.eq.s32.totalorder %v206, %v180
      %vm280 = vcmp.eq.s32.totalorder %v207, %v180
      %vm281 = vcmp.eq.s32.totalorder %v208, %v180
      %vm282 = vcmp.eq.s32.totalorder %v209, %v180
      %vm283 = vcmp.eq.s32.totalorder %v210, %v180
      %vm284 = vcmp.eq.s32.totalorder %v211, %v180
      %v285 = vsel %vm278, %v265, 0.0
      %v286 = vsel %vm279, %v267, 0.0
      %v287 = vsel %vm280, %v269, 0.0
      %v288 = vsel %vm281, %v271, 0.0
      %v289 = vsel %vm282, %v273, 0.0
      %v290 = vsel %vm283, %v275, 0.0
      %v291 = vsel %vm284, %v277, 0.0
      %v292 = vadd.f32 %v285, %v286
      %v293 = vadd.f32 %v292, %v287
      %v294 = vadd.f32 %v293, %v288
      %v295 = vadd.f32 %v294, %v289
      %v296 = vadd.f32 %v295, %v290
      %v297 = vadd.f32 %v296, %v291
      %v298 = vrot.slane %v297, 4
      %v299 = vadd.f32 %v297, %v298
      %v300 = vrot.slane %v299, 2
      %v301 = vadd.f32 %v299, %v300
      %v302 = vrot.slane %v301, 1
      %v303 = vadd.f32 %v301, %v302
      %v304 = vcvt.f32.s32.to.zero.pseudo %v303
      %305 = vst [vmem:[#allocation14] sm:$0x1] %v304
    $region25: #{_p2b_iou_pallas.1} parent=1 // pred_fallthru
      _
    // Predicated region
    $region26: #{_p2b_iou_pallas.1} parent=1 // pred_check
      _
    $region27: #{_p2b_iou_pallas.1} parent=1 // pred_check_branch
      %307 = sbr.rel (0) target = $region29
    $region28: #{_p2b_iou_pallas.1} parent=1 // pred_region
      %s308 = sadd.s32 0, 0
      %310 = vsyncadd [#allocation8], 0
      %s311 = scalar_lea.hbm %s3, %s308
      %s313 = sshll.u32 [#allocation11], 4
      %s314 = int_to_ptr.vmem [resolvable:$true] %s313
      %s315 = sshll.u32 %s311, 4
      %s316 = int_to_ptr.hbm [resolvable:$true] %s315
      %318 = dma.vmem_to_hbm [thread:$0]  %s314, 16, %s316, [#allocation8]
    $region29: #{_p2b_iou_pallas.1} parent=1 // pred_fallthru
      _
    // Predicated region
    $region30: #{_p2b_iou_pallas.1} parent=1 // pred_check
      _
    $region31: #{_p2b_iou_pallas.1} parent=1 // pred_check_branch
      %320 = sbr.rel (0) target = $region33
    $region32: #{_p2b_iou_pallas.1} parent=1 // pred_region
      %322 = vsyncadd [#allocation13], 0
      %s324 = sshll.u32 [#allocation12], 4
      %s325 = int_to_ptr.vmem [resolvable:$true] %s324
      %s326 = sshll.u32 %s4, 4
      %s327 = int_to_ptr.hbm [resolvable:$true] %s326
      %329 = dma.vmem_to_hbm [thread:$0]  %s325, 16, %s327, [#allocation13]
    $region33: #{_p2b_iou_pallas.1} parent=1 // pred_fallthru
      _
    // Predicated region
    $region34: #{_p2b_iou_pallas.1} parent=1 // pred_check
      _
    $region35: #{_p2b_iou_pallas.1} parent=1 // pred_check_branch
      %331 = sbr.rel (0) target = $region37
    $region36: #{_p2b_iou_pallas.1} parent=1 // pred_region
      %333 = vsyncadd [#allocation13], 0
      %s335 = sshll.u32 [#allocation14], 4
      %s336 = int_to_ptr.vmem [resolvable:$true] %s335
      %s337 = sshll.u32 %s5, 4
      %s338 = int_to_ptr.hbm [resolvable:$true] %s337
      %340 = dma.vmem_to_hbm [thread:$0]  %s336, 16, %s338, [#allocation13]
    $region37: #{_p2b_iou_pallas.1} parent=1 // pred_fallthru
      _
    // Predicated region
    $region38: #{_p2b_iou_pallas.1} parent=1 // pred_check
      _
    $region39: #{_p2b_iou_pallas.1} parent=1 // pred_check_branch
      %342 = sbr.rel (0) target = $region41
    $region40: #{_p2b_iou_pallas.1} parent=1 // pred_region
      %344 = dma.done [#allocation8], 16
    $region41: #{_p2b_iou_pallas.1} parent=1 // pred_fallthru
      _
    // Predicated region
    $region42: #{_p2b_iou_pallas.1} parent=1 // pred_check
      _
    $region43: #{_p2b_iou_pallas.1} parent=1 // pred_check_branch
      %346 = sbr.rel (0) target = $region45
    $region44: #{_p2b_iou_pallas.1} parent=1 // pred_region
      %348 = dma.done [#allocation13], 16
    $region45: #{_p2b_iou_pallas.1} parent=1 // pred_fallthru
      _
    // Predicated region
    $region46: #{_p2b_iou_pallas.1} parent=1 // pred_check
      _
    $region47: #{_p2b_iou_pallas.1} parent=1 // pred_check_branch
      %350 = sbr.rel (0) target = $region49
    $region48: #{_p2b_iou_pallas.1} parent=1 // pred_region
      %352 = dma.done [#allocation13], 16
    $region49: #{_p2b_iou_pallas.1} parent=1 // pred_fallthru
      _
    %353 = vsyncpa [#allocation7], 1
    %354 = vsyncpa [#allocation10], 1
    %355 = vsyncpa [#allocation8], 1
    %356 = vsyncpa [#allocation13], 1

</llo_original>
